<compile_context>
chip_gen: v7x
topology: tpu7x:2x2x1
jax: 0.10.0
libtpu: 0.0.40
codegen_flags: <defaults>
</compile_context>

<pallas_src>
import jax
import jax.numpy as jnp
from jax.experimental import pallas as pl
from jax.experimental.pallas import tpu as pltpu

_SUBLANE = 8                        # f32 sublane pack
_VMEM_BUDGET = 12 * 1024 * 1024     # conservative: fits v5e's 16 MiB scoped default


def _round_up(n, m):
    return ((n + m - 1) // m) * m


def _linear_kernel(x_ref, w_ref, b_ref, o_ref):
    # x_ref: [tile, in_dim]  w_ref: [in_dim, out_dim]  b_ref: [1, out_dim]
    acc = jnp.dot(x_ref[...], w_ref[...], preferred_element_type=jnp.float32)
    o_ref[...] = (acc + b_ref[...]).astype(o_ref.dtype)


def _choose_batch_tile(B, in_dim, out_dim, batch_tile):
    """Pick a batch tile: >=2 grid steps when possible, within VMEM budget."""
    tile = batch_tile
    if B >= 2 * _SUBLANE:
        # Cap at ceil(B/2) (rounded to sublane pack) so grid >= 2 -> both TCs on v7x.
        tile = min(tile, _round_up(-(-B // 2), _SUBLANE))

    def vmem_bytes(t):
        # Double-buffered x/out tiles + (conservatively double-counted)
        # resident weight and bias, all f32.
        return (2 * t * in_dim + 2 * t * out_dim
                + 2 * in_dim * out_dim + 2 * out_dim) * 4

    while tile > _SUBLANE and vmem_bytes(tile) > _VMEM_BUDGET:
        tile //= 2
    return max(_round_up(tile, _SUBLANE), _SUBLANE)


def classifier_1_forward(x, w_t, b, *, batch_tile=512, min_pallas_batch=256):
    """x: [B, in_dim], w_t: [in_dim, out_dim] (= W.T), b: [out_dim]."""
    B, in_dim = x.shape
    in_dim_w, out_dim = w_t.shape
    assert in_dim_w == in_dim, "weight / input feature mismatch"

    # Tiny problems: a fused XLA dot beats the pallas_call launch overhead.
    if B <= min_pallas_batch and out_dim <= 16:
        return (jnp.dot(x, w_t) + b).astype(x.dtype)

    tile = _choose_batch_tile(B, in_dim, out_dim, batch_tile)
    grid = (pl.cdiv(B, tile),)   # last block may overhang; its stores are masked

    b2 = b.reshape(1, out_dim).astype(jnp.float32)

    cost = pl.CostEstimate(
        flops=2 * B * in_dim * out_dim,
        transcendentals=0,
        bytes_accessed=(B * in_dim + in_dim * out_dim + out_dim + B * out_dim) * 4,
    )

    out = pl.pallas_call(
        _linear_kernel,
        out_shape=jax.ShapeDtypeStruct((B, out_dim), jnp.float32),
        grid_spec=pltpu.PrefetchScalarGridSpec(
            num_scalar_prefetch=0,
            grid=grid,
            in_specs=[
                # Full-extent feature dims -> no 128-padding needed.
                pl.BlockSpec((tile, in_dim), lambda i: (i, 0)),
                pl.BlockSpec((in_dim, out_dim), lambda i: (0, 0)),   # resident
                pl.BlockSpec((1, out_dim), lambda i: (0, 0)),        # resident
            ],
            out_specs=pl.BlockSpec((tile, out_dim), lambda i: (i, 0)),
        ),
        compiler_params=pltpu.CompilerParams(
            # Batch tiles are independent -> lets v7x's second TC take half.
            dimension_semantics=("parallel",),
        ),
        cost_estimate=cost,
    )(x.astype(jnp.float32), w_t.astype(jnp.float32), b2)

    return out.astype(x.dtype)


def init_classifier_1(key, in_dim, out_dim):
    """Deterministic xavier_normal_ init matching the PyTorch module.

    nn.init.xavier_normal_: std = sqrt(2 / (fan_in + fan_out)); bias = 0.
    Returns W_t ([in_dim, out_dim], i.e. W.T) and b ([out_dim]).
    """
    std = jnp.sqrt(2.0 / (in_dim + out_dim)).astype(jnp.float32)
    w = jax.random.normal(key, (out_dim, in_dim), dtype=jnp.float32) * std
    b = jnp.zeros((out_dim,), dtype=jnp.float32)
    return w.T, b


if __name__ == "__main__":
    key = jax.random.PRNGKey(0)
    k_x, k_w, k_b, k_x2 = jax.random.split(key, 4)

    # MOGONET-style classifier head: hidden features -> num_classes.
    in_dim, out_dim = 100, 5
    w_t, b0 = init_classifier_1(k_w, in_dim, out_dim)
    # Use a nonzero bias for the test so the bias path is actually verified.
    b = b0 + 0.1 * jax.random.normal(k_b, (out_dim,), dtype=jnp.float32)

    # Pallas grid path: batch big enough to amortize launch + split over TCs,
    # and deliberately NOT a multiple of the tile (exercises masked tail block).
    B = 300
    x = jax.random.normal(k_x, (B, in_dim), dtype=jnp.float32)
    out = jax.block_until_ready(classifier_1_forward(x, w_t, b))
    ref = x @ w_t + b
    assert out.shape == (B, out_dim)
    assert jnp.allclose(out, ref, atol=2e-2, rtol=2e-2), "grid-path mismatch"

    # Tiny-batch path dispatches to the fused XLA dot (launch not worth it).
    x_small = jax.random.normal(k_x2, (8, in_dim), dtype=jnp.float32)
    out_small = jax.block_until_ready(classifier_1_forward(x_small, w_t, b))
    ref_small = x_small @ w_t + b
    assert out_small.shape == (8, out_dim)
    assert jnp.allclose(out_small, ref_small, atol=2e-2, rtol=2e-2), "tiny mismatch"

    print("KERNEL_OK")
</pallas_src>

<mosaic_0001>
module attributes {stable_mosaic.version = 11 : i64} {
  func.func @_linear_kernel(%arg0: i32, %arg1: memref<152x100xf32, #tpu.memory_space<vmem>>, %arg2: memref<100x5xf32, #tpu.memory_space<vmem>>, %arg3: memref<1x5xf32, #tpu.memory_space<vmem>>, %arg4: memref<152x5xf32, #tpu.memory_space<vmem>>) attributes {dimension_semantics = [#tpu.dimension_semantics<parallel>], iteration_bounds = array<i64: 2>, scalar_prefetch = 0 : i64, scratch_operands = 0 : i64, tpu.core_type = #tpu.core_type<tc>, window_params = [{transform_indices = @transform_0, window_bounds = array<i64: 152, 100>}, {pipeline_mode = #tpu.pipeline_mode<synchronous>, transform_indices = @transform_1, window_bounds = array<i64: 100, 5>}, {pipeline_mode = #tpu.pipeline_mode<synchronous>, transform_indices = @transform_2, window_bounds = array<i64: 1, 5>}, {transform_indices = @transform_3, window_bounds = array<i64: 152, 5>}]} {
    %c0 = arith.constant 0 : index
    %c0_0 = arith.constant 0 : index
    %0 = vector.load %arg1[%c0, %c0_0] : memref<152x100xf32, #tpu.memory_space<vmem>>, vector<152x100xf32>
    %c0_1 = arith.constant 0 : index
    %c0_2 = arith.constant 0 : index
    %1 = vector.load %arg2[%c0_1, %c0_2] : memref<100x5xf32, #tpu.memory_space<vmem>>, vector<100x5xf32>
    %cst = arith.constant dense<0.000000e+00> : vector<152x5xf32>
    %2 = tpu.matmul %0, %1, %cst {dimension_numbers = #tpu.dot_dimension_numbers<[1], [0], [0], [1], [0, 0, 1, 1], [], []>} : vector<152x100xf32>, vector<100x5xf32>, vector<152x5xf32> -> vector<152x5xf32>
    %c0_3 = arith.constant 0 : index
    %c0_4 = arith.constant 0 : index
    %3 = vector.load %arg3[%c0_3, %c0_4] : memref<1x5xf32, #tpu.memory_space<vmem>>, vector<1x5xf32>
    %4 = vector.broadcast %3 : vector<1x5xf32> to vector<152x5xf32>
    %5 = arith.addf %2, %4 : vector<152x5xf32>
    %c0_5 = arith.constant 0 : index
    %c0_6 = arith.constant 0 : index
    %6 = vector.load %arg4[%c0_5, %c0_6] : memref<152x5xf32, #tpu.memory_space<vmem>>, vector<152x5xf32>
    tpu.vector_store %arg4[%c0_5, %c0_6], %5 {strides = array<i32>} : memref<152x5xf32, #tpu.memory_space<vmem>>, vector<152x5xf32>,
    return
  }
  func.func @transform_0(%arg0: i32) -> (i32, i32) {
    %c0_i32 = arith.constant 0 : i32
    %c0_i32_0 = arith.constant 0 : i32
    return %arg0, %c0_i32 : i32, i32
  }
  func.func @transform_1(%arg0: i32) -> (i32, i32) {
    %c0_i32 = arith.constant 0 : i32
    %c0_i32_0 = arith.constant 0 : i32
    %c0_i32_1 = arith.constant 0 : i32
    return %c0_i32, %c0_i32_0 : i32, i32
  }
  func.func @transform_2(%arg0: i32) -> (i32, i32) {
    %c0_i32 = arith.constant 0 : i32
    %c0_i32_0 = arith.constant 0 : i32
    %c0_i32_1 = arith.constant 0 : i32
    return %c0_i32, %c0_i32_0 : i32, i32
  }
  func.func @transform_3(%arg0: i32) -> (i32, i32) {
    %c0_i32 = arith.constant 0 : i32
    %c0_i32_0 = arith.constant 0 : i32
    return %arg0, %c0_i32 : i32, i32
  }
}

</mosaic_0001>

<llo_original>
// kernel: tpu_custom_call.1
$region0: #{tpu_custom_call.1}
  #allocation0 [shape = 'u32[]', space=smem, size = 0x4, offset = 0x4, fixed_abs, tag = 'smem constant byte address 0x4 - core index']
  #allocation1 [shape = 'u32[144,128]{1,0:T(1,128)}', space=vmem, size = 0x12000, scoped, tag = 'internal scratch']
  %s0 = inlined_call_operand.hbm [shape: f32[300,100], index: 0, kind: input, shape index: {}]
  %s1 = inlined_call_operand.vmem [shape: f32[100,5], index: 1, kind: input, shape index: {}]
  %s2 = inlined_call_operand.vmem [shape: f32[1,5], index: 2, kind: input, shape index: {}]
  %s3 = inlined_call_operand.vmem [shape: f32[300,5], index: 3, kind: output, shape index: {}]
  %s4 = sld [smem:[#allocation0]]
  $region49: #{tpu_custom_call.1} parent=0
    _
  %s6 = ssub.s32 1, %s4
  %s7 = scalar_select 0, %s6, %s4
  $region1: #{tpu_custom_call.1} parent=0
    #allocation2 [shape = 'u8[155648]{0}', space=vmem, size = 0x26000, scoped, tag = 'input window, operand 0']
    #allocation3 [shape = 's32[2]{0}', space=sflag, size = 0x8, scoped, tag = 'scoped memory for tpu_custom_call.1']
    %8 = vsyncpa [#allocation3], 0
    %s9 = scalar_lea.sflag [#allocation3], 1
    %10 = vsyncpa %s9, 0
    loop: start=0, step=1, limit=4
    $region2: #{tpu_custom_call.1} parent=1 // loop_pre_header
      _
    $region3: #{tpu_custom_call.1} parent=1 // loop_header
      %s12 = sphi 0, %s16
      %p13 = scmp.ge.s32.totalorder %s12, 4
      %s22 = sphi 0, %s24
      %s25 = sphi 0, %s22
      %s26 = sphi 0, %s25
      %s42 = sphi 0, %s26
      %s46 = sphi 0, %s46
      %s48 = sphi 0, %s46
      %s49 = sphi 0, %s48
      %s63 = sphi 0, %s49
      %s67 = sphi 0, %s67
      %s69 = sphi 0, %s67
      %s70 = sphi 0, %s69
      %s84 = sphi 0, %s70
      %s90 = sphi 0, %s92
      %s93 = sphi 0, %s90
      %s94 = sphi 0, %s93
      %s110 = sphi 0, %s94
    $region4: #{tpu_custom_call.1} parent=1 // loop_header_branch
      %15 = sbr.rel (%p13) target = $region8
    $region5: #{tpu_custom_call.1} parent=1 // loop_body
      %s17 = ssub.s32 %s12, 1
      %s18 = ssub.s32 %s12, 2
      %s19 = sadd.s32 %s12, 1
      %s20 = ssub.s32 %s12, %s19
      %p21 = scmp.eq.s32.totalorder %s20, 0
      %s23 = sadd.s32 %s22, 1
      %s24 = scalar_select %p21, %s22, %s23
      %p27 = pneg %p21
      %p28 = scmp.eq.s32.totalorder %s12, 1
      %p29 = por %p27, %p28
      %p30 = scmp.ne.s32.totalorder %s22, %s25
      %p31 = scmp.eq.s32.totalorder %s12, 0
      %p32 = por %p30, %p31
      %p33 = scmp.ne.s32.totalorder %s22, %s25
      %p34 = scmp.eq.s32.totalorder %s17, 1
      %p35 = por %p33, %p34
      %p36 = scmp.ne.s32.totalorder %s25, %s26
      %p37 = scmp.eq.s32.totalorder %s17, 0
      %p38 = por %p36, %p37
      %p39 = scmp.ne.s32.totalorder %s25, %s26
      %p40 = scmp.eq.s32.totalorder %s18, 1
      %p41 = por %p39, %p40
      %p43 = scmp.ne.s32.totalorder %s26, %s42
      %p44 = scmp.eq.s32.totalorder %s18, 0
      %p45 = por %p43, %p44
      %s47 = sadd.s32 %s46, 1
      %p50 = scmp.eq.s32.totalorder %s12, 1
      %p51 = scmp.ne.s32.totalorder %s46, %s48
      %p52 = scmp.eq.s32.totalorder %s12, 0
      %p53 = por %p51, %p52
      %p54 = scmp.ne.s32.totalorder %s46, %s48
      %p55 = scmp.eq.s32.totalorder %s17, 1
      %p56 = por %p54, %p55
      %p57 = scmp.ne.s32.totalorder %s48, %s49
      %p58 = scmp.eq.s32.totalorder %s17, 0
      %p59 = por %p57, %p58
      %p60 = scmp.ne.s32.totalorder %s48, %s49
      %p61 = scmp.eq.s32.totalorder %s18, 1
      %p62 = por %p60, %p61
      %p64 = scmp.ne.s32.totalorder %s49, %s63
      %p65 = scmp.eq.s32.totalorder %s18, 0
      %p66 = por %p64, %p65
      %s68 = sadd.s32 %s67, 1
      %p71 = scmp.eq.s32.totalorder %s12, 1
      %p72 = scmp.ne.s32.totalorder %s67, %s69
      %p73 = scmp.eq.s32.totalorder %s12, 0
      %p74 = por %p72, %p73
      %p75 = scmp.ne.s32.totalorder %s67, %s69
      %p76 = scmp.eq.s32.totalorder %s17, 1
      %p77 = por %p75, %p76
      %p78 = scmp.ne.s32.totalorder %s69, %s70
      %p79 = scmp.eq.s32.totalorder %s17, 0
      %p80 = por %p78, %p79
      %p81 = scmp.ne.s32.totalorder %s69, %s70
      %p82 = scmp.eq.s32.totalorder %s18, 1
      %p83 = por %p81, %p82
      %p85 = scmp.ne.s32.totalorder %s70, %s84
      %p86 = scmp.eq.s32.totalorder %s18, 0
      %p87 = por %p85, %p86
      %s88 = ssub.s32 %s12, %s19
      %p89 = scmp.eq.s32.totalorder %s88, 0
      %s91 = sadd.s32 %s90, 1
      %s92 = scalar_select %p89, %s90, %s91
      %p95 = pneg %p89
      %p96 = scmp.eq.s32.totalorder %s12, 1
      %p97 = por %p95, %p96
      %p98 = scmp.ne.s32.totalorder %s90, %s93
      %p99 = scmp.eq.s32.totalorder %s12, 0
      %p100 = por %p98, %p99
      %p101 = scmp.ne.s32.totalorder %s90, %s93
      %p102 = scmp.eq.s32.totalorder %s17, 1
      %p103 = por %p101, %p102
      %p104 = scmp.ne.s32.totalorder %s93, %s94
      %p105 = scmp.eq.s32.totalorder %s17, 0
      %p106 = por %p104, %p105
      %p107 = scmp.ne.s32.totalorder %s93, %s94
      %p108 = scmp.eq.s32.totalorder %s18, 1
      %p109 = por %p107, %p108
      %p111 = scmp.ne.s32.totalorder %s94, %s110
      %p112 = scmp.eq.s32.totalorder %s18, 0
      %p113 = por %p111, %p112
      %p114 = scmp.le.s32.totalorder 1, %s12
      %p115 = scmp.lt.s32.totalorder %s12, 3
      %p116 = pnand %p114, %p115
      %p117 = pneg %p116
      // Predicated region
      $region9: #{tpu_custom_call.1} parent=5 // pred_check
        _
      $region10: #{tpu_custom_call.1} parent=5 // pred_check_branch
        %119 = sbr.rel (%p116) target = $region12
      $region11: #{tpu_custom_call.1} parent=5 // pred_region
        %s120 = ssub.s32 %s12, 1
        // Predicated region
        $region13: #{tpu_custom_call.1} parent=11 // pred_check
          %p121 = pneg %p59
        $region14: #{tpu_custom_call.1} parent=11 // pred_check_branch
          %123 = sbr.rel (%p121) target = $region16
        $region15: #{tpu_custom_call.1} parent=11 // pred_region
          _
        $region16: #{tpu_custom_call.1} parent=11 // pred_fallthru
          _
        // Predicated region
        $region17: #{tpu_custom_call.1} parent=11 // pred_check
          %p124 = pneg %p80
        $region18: #{tpu_custom_call.1} parent=11 // pred_check_branch
          %126 = sbr.rel (%p124) target = $region20
        $region19: #{tpu_custom_call.1} parent=11 // pred_region
          _
        $region20: #{tpu_custom_call.1} parent=11 // pred_fallthru
          _
      $region12: #{tpu_custom_call.1} parent=5 // pred_fallthru
        _
      %p127 = scmp.lt.s32.totalorder %s12, 2
      // Predicated region
      $region21: #{tpu_custom_call.1} parent=5 // pred_check
        %p128 = pneg %p127
      $region22: #{tpu_custom_call.1} parent=5 // pred_check_branch
        %130 = sbr.rel (%p128) target = $region24
      $region23: #{tpu_custom_call.1} parent=5 // pred_region
        // Predicated region
        $region25: #{tpu_custom_call.1} parent=23 // pred_check
          %p131 = pneg %p32
        $region26: #{tpu_custom_call.1} parent=23 // pred_check_branch
          %133 = sbr.rel (%p131) target = $region28
        $region27: #{tpu_custom_call.1} parent=23 // pred_region
          %s134 = sand.u32 %s22, 1
          %s135 = scalar_lea.sflag [#allocation3], %s134
          %s136 = sand.u32 %s22, 1
          %s137 = smul.addr %s136, 152
          %s138 = scalar_lea.vmem [#allocation2], %s137
          %s139 = smul.u32 19, %s12
          %s141 = ssub.s32 2432, 2432
          %142 = vsyncadd %s135, %s141
          %s143 = smul.addr %s139, 128
          %s144 = scalar_lea.hbm %s0, %s143
          %s145 = sshll.u32 %s138, 4
          %s146 = int_to_ptr.vmem [resolvable:$true] %s145
          %151 = dma.hbm_to_vmem [thread:$0]  %s144, 2432, %s146, %s135, 128, 128, 8
        $region28: #{tpu_custom_call.1} parent=23 // pred_fallthru
          _
      $region24: #{tpu_custom_call.1} parent=5 // pred_fallthru
        _
      %p152 = scmp.le.s32.totalorder 1, %s12
      %p153 = scmp.lt.s32.totalorder %s12, 3
      %p154 = pnand %p152, %p153
      %p155 = pneg %p154
      // Predicated region
      $region29: #{tpu_custom_call.1} parent=5 // pred_check
        _
      $region30: #{tpu_custom_call.1} parent=5 // pred_check_branch
        %157 = sbr.rel (%p154) target = $region32
      $region31: #{tpu_custom_call.1} parent=5 // pred_region
        %s158 = ssub.s32 %s12, 1
        %s159 = sand.u32 %s25, 1
        %s160 = scalar_lea.sflag [#allocation3], %s159
        %s161 = sand.u32 %s25, 1
        %s162 = smul.addr %s161, 152
        %s163 = scalar_lea.vmem [#allocation2], %s162
        // Predicated region
        $region33: #{tpu_custom_call.1} parent=31 // pred_check
          %p164 = pneg %p38
        $region34: #{tpu_custom_call.1} parent=31 // pred_check_branch
          %166 = sbr.rel (%p164) target = $region36
        $region35: #{tpu_custom_call.1} parent=31 // pred_region
          %167 = dma.done %s160, 2432
        $region36: #{tpu_custom_call.1} parent=31 // pred_fallthru
          _
        %s168 = sand.u32 %s25, 1
        %s169 = scalar_lea.sflag [#allocation3], %s168
        %s170 = sand.u32 %s25, 1
        %s171 = smul.addr %s170, 152
        %s172 = scalar_lea.vmem [#allocation2], %s171
        %p173 = pneg %p38
        %p174 = pneg %p35
        %p175 = pneg %p59
        %p176 = pneg %p56
        %p177 = pneg %p80
        %p178 = pneg %p77
        %p179 = pneg %p106
        %p180 = pneg %p103
        %s181 = smul.u32 19, %s17
        %p182 = scmp.lt.s32.totalorder %s181, 37
        %s183 = scalar_select %p182, %s181, 37
        %s184 = smul.addr %s183, 8
        %s185 = scalar_lea.vmem %s3, %s184
        %s186 = smul.u32 19, %s17
        %s187 = smul.u32 19, %s17
        %p188 = scmp.lt.s32.totalorder %s187, 37
        %s189 = scalar_select %p188, %s187, 37
        %s190 = smul.addr %s189, 8
        %s191 = scalar_lea.vmem %s3, %s190
        %s192 = smul.u32 19, %s17
        %v193 = vld [vmem:[%s163] sm:$0xff]
        %v194 = vld [vmem:[%s163 + $0x8] sm:$0xff]
        %v195 = vld [vmem:[%s163 + $0x10] sm:$0xff]
        %v196 = vld [vmem:[%s163 + $0x18] sm:$0xff]
        %v197 = vld [vmem:[%s163 + $0x20] sm:$0xff]
        %v198 = vld [vmem:[%s163 + $0x28] sm:$0xff]
        %v199 = vld [vmem:[%s163 + $0x30] sm:$0xff]
        %v200 = vld [vmem:[%s163 + $0x38] sm:$0xff]
        %v201 = vld [vmem:[%s163 + $0x40] sm:$0xff]
        %v202 = vld [vmem:[%s163 + $0x48] sm:$0xff]
        %v203 = vld [vmem:[%s163 + $0x50] sm:$0xff]
        %v204 = vld [vmem:[%s163 + $0x58] sm:$0xff]
        %v205 = vld [vmem:[%s163 + $0x60] sm:$0xff]
        %v206 = vld [vmem:[%s163 + $0x68] sm:$0xff]
        %v207 = vld [vmem:[%s163 + $0x70] sm:$0xff]
        %v208 = vld [vmem:[%s163 + $0x78] sm:$0xff]
        %v209 = vld [vmem:[%s163 + $0x80] sm:$0xff]
        %v210 = vld [vmem:[%s163 + $0x88] sm:$0xff]
        %v211 = vld [vmem:[%s163 + $0x90] sm:$0xff]
        %v212 = vld [vmem:[%s1] sm:$0xff]
        %v213 = vld [vmem:[%s1 + $0x8] sm:$0xff]
        %v214 = vld [vmem:[%s1 + $0x10] sm:$0xff]
        %v215 = vld [vmem:[%s1 + $0x18] sm:$0xff]
        %v216 = vld [vmem:[%s1 + $0x20] sm:$0xff]
        %v217 = vld [vmem:[%s1 + $0x28] sm:$0xff]
        %v218 = vld [vmem:[%s1 + $0x30] sm:$0xff]
        %v219 = vld [vmem:[%s1 + $0x38] sm:$0xff]
        %v220 = vld [vmem:[%s1 + $0x40] sm:$0xff]
        %v221 = vld [vmem:[%s1 + $0x48] sm:$0xff]
        %v222 = vld [vmem:[%s1 + $0x50] sm:$0xff]
        %v223 = vld [vmem:[%s1 + $0x58] sm:$0xff]
        %v224 = vld [vmem:[%s1 + $0x60] sm:$0xf]
        %v225 = vld [vmem:[%s2] sm:$0x1]
        %v227 = vlaneseq
        %v228 = vshrl.u32 %v227, 7
        %v229 = vsub.s32 0, %v228
        %v230 = vrot.slane %v225, %v229
        %vm232 = vcmask 818176
        %v234 = vsel %vm232, %v193, 0
        %v237 = vsel %vm232, %v194, 0
        %v240 = vsel %vm232, %v195, 0
        %v243 = vsel %vm232, %v196, 0
        %v246 = vsel %vm232, %v197, 0
        %v249 = vsel %vm232, %v198, 0
        %v252 = vsel %vm232, %v199, 0
        %v255 = vsel %vm232, %v200, 0
        %v258 = vsel %vm232, %v201, 0
        %v261 = vsel %vm232, %v202, 0
        %v264 = vsel %vm232, %v203, 0
        %v267 = vsel %vm232, %v204, 0
        %v270 = vsel %vm232, %v205, 0
        %v273 = vsel %vm232, %v206, 0
        %v276 = vsel %vm232, %v207, 0
        %v279 = vsel %vm232, %v208, 0
        %v282 = vsel %vm232, %v209, 0
        %v285 = vsel %vm232, %v210, 0
        %v288 = vsel %vm232, %v211, 0
        %vm290 = vcmask 1043456
        %v292 = vsel %vm290, %v224, 0
        %294 = vmatprep.subr.mxu0 0.0
        %295 = vmatpush1.msra.mxu0 %v212
        %296 = vmatprep.subr.mxu0 0.0
        %297 = vmatpush1.msra.mxu0 %v213
        %298 = vmatprep.subr.mxu0 0.0
        %299 = vmatpush1.msra.mxu0 %v214
        %300 = vmatprep.subr.mxu0 0.0
        %301 = vmatpush1.msra.mxu0 %v215
        %302 = vmatprep.subr.mxu0 0.0
        %303 = vmatpush1.msra.mxu0 %v216
        %304 = vmatprep.subr.mxu0 0.0
        %305 = vmatpush1.msra.mxu0 %v217
        %306 = vmatprep.subr.mxu0 0.0
        %307 = vmatpush1.msra.mxu0 %v218
        %308 = vmatprep.subr.mxu0 0.0
        %309 = vmatpush1.msra.mxu0 %v219
        %310 = vmatprep.subr.mxu0 0.0
        %311 = vmatpush1.msra.mxu0 %v220
        %312 = vmatprep.subr.mxu0 0.0
        %313 = vmatpush1.msra.mxu0 %v221
        %314 = vmatprep.subr.mxu0 0.0
        %315 = vmatpush1.msra.mxu0 %v222
        %316 = vmatprep.subr.mxu0 0.0
        %317 = vmatpush1.msra.mxu0 %v223
        %318 = vmatprep.subr.mxu0 0.0
        %319 = vmatpush1.msra.mxu0 %v292
        %320 = vmatprep.subr.mxu0 0.0
        %321 = vmatpush1.msra.mxu0 0.0
        %322 = vmatprep.subr.mxu0 0.0
        %323 = vmatpush1.msra.mxu0 0.0
        %324 = vmatprep.subr.mxu0 0.0
        %325 = vmatpush1.msra.mxu0 0.0
        %326 = vmatprep.subr.mxu0 0.0
        %327 = vmatpush1.msra.mxu0 0.0
        %328 = vmatprep.subr.mxu0 0.0
        %329 = vmatpush1.msra.mxu0 0.0
        %330 = vmatprep.subr.mxu0 0.0
        %331 = vmatpush1.msra.mxu0 0.0
        %332 = vmatprep.subr.mxu0 0.0
        %333 = vmatpush1.msra.mxu0 0.0
        %334 = vmatprep.subr.mxu0 0.0
        %335 = vmatpush1.msra.mxu0 0.0
        %336 = vmatprep.subr.mxu0 0.0
        %337 = vmatpush1.msra.mxu0 0.0
        %338 = vmatprep.subr.mxu0 0.0
        %339 = vmatpush1.msra.mxu0 0.0
        %340 = vmatprep.subr.mxu0 0.0
        %341 = vmatpush1.msra.mxu0 0.0
        %342 = vmatprep.subr.mxu0 0.0
        %343 = vmatpush1.msra.mxu0 0.0
        %344 = vmatprep.subr.mxu0 0.0
        %345 = vmatpush1.msra.mxu0 0.0
        %346 = vmatprep.subr.mxu0 0.0
        %347 = vmatpush1.msra.mxu0 0.0
        %348 = vmatprep.subr.mxu0 0.0
        %349 = vmatpush1.msra.mxu0 0.0
        %350 = vmatprep.subr.mxu0 0.0
        %351 = vmatpush1.msra.mxu0 0.0
        %352 = vmatprep.subr.mxu0 0.0
        %353 = vmatpush1.msra.mxu0 0.0
        %354 = vmatprep.subr.mxu0 0.0
        %355 = vmatpush1.msra.mxu0 0.0
        %356 = vmatprep.subr.mxu0 0.0
        %357 = vmatpush1.msra.mxu0 0.0
        %358 = vmatprep.mubr.f32.mxu0 0.0
        %359 = vmatmul.mubr.f32.gmra.mrb[0].mxu0 %v234
        %v360 = vpop.f32.mrb[0].mxu0
        %v361 = vadd.f32 %v230, %v360
        %v362 = vpop.f32.mrb[0].mxu0
        %363 = vmatprep.mubr.f32.mxu0 0.0
        %364 = vmatmul.mubr.f32.gmra.mrb[0].mxu0 %v237
        %v365 = vpop.f32.mrb[0].mxu0
        %v366 = vadd.f32 %v230, %v365
        %v367 = vpop.f32.mrb[0].mxu0
        %368 = vmatprep.mubr.f32.mxu0 0.0
        %369 = vmatmul.mubr.f32.gmra.mrb[0].mxu0 %v240
        %v370 = vpop.f32.mrb[0].mxu0
        %v371 = vadd.f32 %v230, %v370
        %v372 = vpop.f32.mrb[0].mxu0
        %373 = vmatprep.mubr.f32.mxu0 0.0
        %374 = vmatmul.mubr.f32.gmra.mrb[0].mxu0 %v243
        %v375 = vpop.f32.mrb[0].mxu0
        %v376 = vadd.f32 %v230, %v375
        %v377 = vpop.f32.mrb[0].mxu0
        %378 = vmatprep.mubr.f32.mxu0 0.0
        %379 = vmatmul.mubr.f32.gmra.mrb[0].mxu0 %v246
        %v380 = vpop.f32.mrb[0].mxu0
        %v381 = vadd.f32 %v230, %v380
        %v382 = vpop.f32.mrb[0].mxu0
        %383 = vmatprep.mubr.f32.mxu0 0.0
        %384 = vmatmul.mubr.f32.gmra.mrb[0].mxu0 %v249
        %v385 = vpop.f32.mrb[0].mxu0
        %v386 = vadd.f32 %v230, %v385
        %v387 = vpop.f32.mrb[0].mxu0
        %388 = vmatprep.mubr.f32.mxu0 0.0
        %389 = vmatmul.mubr.f32.gmra.mrb[0].mxu0 %v252
        %v390 = vpop.f32.mrb[0].mxu0
        %v391 = vadd.f32 %v230, %v390
        %v392 = vpop.f32.mrb[0].mxu0
        %393 = vmatprep.mubr.f32.mxu0 0.0
        %394 = vmatmul.mubr.f32.gmra.mrb[0].mxu0 %v255
        %v395 = vpop.f32.mrb[0].mxu0
        %v396 = vadd.f32 %v230, %v395
        %v397 = vpop.f32.mrb[0].mxu0
        %398 = vmatprep.mubr.f32.mxu0 0.0
        %399 = vmatmul.mubr.f32.gmra.mrb[0].mxu0 %v258
        %v400 = vpop.f32.mrb[0].mxu0
        %v401 = vadd.f32 %v230, %v400
        %v402 = vpop.f32.mrb[0].mxu0
        %403 = vmatprep.mubr.f32.mxu0 0.0
        %404 = vmatmul.mubr.f32.gmra.mrb[0].mxu0 %v261
        %v405 = vpop.f32.mrb[0].mxu0
        %v406 = vadd.f32 %v230, %v405
        %v407 = vpop.f32.mrb[0].mxu0
        %408 = vmatprep.mubr.f32.mxu0 0.0
        %409 = vmatmul.mubr.f32.gmra.mrb[0].mxu0 %v264
        %v410 = vpop.f32.mrb[0].mxu0
        %v411 = vadd.f32 %v230, %v410
        %v412 = vpop.f32.mrb[0].mxu0
        %413 = vmatprep.mubr.f32.mxu0 0.0
        %414 = vmatmul.mubr.f32.gmra.mrb[0].mxu0 %v267
        %v415 = vpop.f32.mrb[0].mxu0
        %v416 = vadd.f32 %v230, %v415
        %v417 = vpop.f32.mrb[0].mxu0
        %418 = vmatprep.mubr.f32.mxu0 0.0
        %419 = vmatmul.mubr.f32.gmra.mrb[0].mxu0 %v270
        %v420 = vpop.f32.mrb[0].mxu0
        %v421 = vadd.f32 %v230, %v420
        %v422 = vpop.f32.mrb[0].mxu0
        %423 = vmatprep.mubr.f32.mxu0 0.0
        %424 = vmatmul.mubr.f32.gmra.mrb[0].mxu0 %v273
        %v425 = vpop.f32.mrb[0].mxu0
        %v426 = vadd.f32 %v230, %v425
        %v427 = vpop.f32.mrb[0].mxu0
        %428 = vmatprep.mubr.f32.mxu0 0.0
        %429 = vmatmul.mubr.f32.gmra.mrb[0].mxu0 %v276
        %v430 = vpop.f32.mrb[0].mxu0
        %v431 = vadd.f32 %v230, %v430
        %v432 = vpop.f32.mrb[0].mxu0
        %433 = vmatprep.mubr.f32.mxu0 0.0
        %434 = vmatmul.mubr.f32.gmra.mrb[0].mxu0 %v279
        %v435 = vpop.f32.mrb[0].mxu0
        %v436 = vadd.f32 %v230, %v435
        %v437 = vpop.f32.mrb[0].mxu0
        %438 = vmatprep.mubr.f32.mxu0 0.0
        %439 = vmatmul.mubr.f32.gmra.mrb[0].mxu0 %v282
        %v440 = vpop.f32.mrb[0].mxu0
        %v441 = vadd.f32 %v230, %v440
        %v442 = vpop.f32.mrb[0].mxu0
        %443 = vmatprep.mubr.f32.mxu0 0.0
        %444 = vmatmul.mubr.f32.gmra.mrb[0].mxu0 %v285
        %v445 = vpop.f32.mrb[0].mxu0
        %v446 = vadd.f32 %v230, %v445
        %v447 = vpop.f32.mrb[0].mxu0
        %448 = vmatprep.mubr.f32.mxu0 0.0
        %449 = vmatmul.mubr.f32.gmra.mrb[0].mxu0 %v288
        %v450 = vpop.f32.mrb[0].mxu0
        %v451 = vadd.f32 %v230, %v450
        %v452 = vpop.f32.mrb[0].mxu0
        %453 = vdwg.mxu0
        %vm454 = vcmask 39936
        %455 = vst.msk [vmem:[%s191] sm:$0xff] %vm454, %v361
        %456 = vst.msk [vmem:[%s191 + $0x8] sm:$0xff] %vm454, %v366
        %457 = vst.msk [vmem:[%s191 + $0x10] sm:$0xff] %vm454, %v371
        %458 = vst.msk [vmem:[%s191 + $0x18] sm:$0xff] %vm454, %v376
        %459 = vst.msk [vmem:[%s191 + $0x20] sm:$0xff] %vm454, %v381
        %460 = vst.msk [vmem:[%s191 + $0x28] sm:$0xff] %vm454, %v386
        %461 = vst.msk [vmem:[%s191 + $0x30] sm:$0xff] %vm454, %v391
        %462 = vst.msk [vmem:[%s191 + $0x38] sm:$0xff] %vm454, %v396
        %463 = vst.msk [vmem:[%s191 + $0x40] sm:$0xff] %vm454, %v401
        %464 = vst.msk [vmem:[%s191 + $0x48] sm:$0xff] %vm454, %v406
        %465 = vst.msk [vmem:[%s191 + $0x50] sm:$0xff] %vm454, %v411
        %466 = vst.msk [vmem:[%s191 + $0x58] sm:$0xff] %vm454, %v416
        %467 = vst.msk [vmem:[%s191 + $0x60] sm:$0xff] %vm454, %v421
        %468 = vst.msk [vmem:[%s191 + $0x68] sm:$0xff] %vm454, %v426
        %469 = vst.msk [vmem:[%s191 + $0x70] sm:$0xff] %vm454, %v431
        %470 = vst.msk [vmem:[%s191 + $0x78] sm:$0xff] %vm454, %v436
        %471 = vst.msk [vmem:[%s191 + $0x80] sm:$0xff] %vm454, %v441
        %472 = vst.msk [vmem:[%s191 + $0x88] sm:$0xff] %vm454, %v446
        %473 = vst.msk [vmem:[%s191 + $0x90] sm:$0xff] %vm454, %v451
        %s474 = smul.u32 19, %s17
        %p475 = scmp.lt.s32.totalorder %s474, 37
        %s476 = scalar_select %p475, %s474, 37
        %s477 = smul.addr %s476, 8
        %s478 = scalar_lea.vmem %s3, %s477
        // Predicated region
        $region37: #{tpu_custom_call.1} parent=31 // pred_check
          %p479 = pneg %p103
        $region38: #{tpu_custom_call.1} parent=31 // pred_check_branch
          %481 = sbr.rel (%p479) target = $region40
        $region39: #{tpu_custom_call.1} parent=31 // pred_region
          %s482 = smul.u32 19, %s17
        $region40: #{tpu_custom_call.1} parent=31 // pred_fallthru
          _
      $region32: #{tpu_custom_call.1} parent=5 // pred_fallthru
        _
      %p483 = scmp.le.s32.totalorder 2, %s12
      // Predicated region
      $region41: #{tpu_custom_call.1} parent=5 // pred_check
        %p484 = pneg %p483
      $region42: #{tpu_custom_call.1} parent=5 // pred_check_branch
        %486 = sbr.rel (%p484) target = $region44
      $region43: #{tpu_custom_call.1} parent=5 // pred_region
        %s487 = ssub.s32 %s12, 2
        // Predicated region
        $region45: #{tpu_custom_call.1} parent=43 // pred_check
          %p488 = pneg %p109
        $region46: #{tpu_custom_call.1} parent=43 // pred_check_branch
          %490 = sbr.rel (%p488) target = $region48
        $region47: #{tpu_custom_call.1} parent=43 // pred_region
          %s491 = smul.u32 19, %s18
          %p492 = scmp.lt.s32.totalorder %s491, 37
          %s493 = scalar_select %p492, %s491, 37
          %s494 = smul.addr %s493, 8
          %s495 = scalar_lea.vmem %s3, %s494
        $region48: #{tpu_custom_call.1} parent=43 // pred_fallthru
          _
      $region44: #{tpu_custom_call.1} parent=5 // pred_fallthru
        _
    $region6: #{tpu_custom_call.1} parent=1 // loop_footer
      %s16 = sadd.s32 1, %s12
    $region7: #{tpu_custom_call.1} parent=1 // loop_footer_branch
      %11 = sbr.rel target = $region3
    $region8: #{tpu_custom_call.1} parent=1 // loop_exit
      _
    %496 = vsyncpa [#allocation3], 1
    %s497 = scalar_lea.sflag [#allocation3], 1
    %498 = vsyncpa %s497, 1

</llo_original>
